<compile_context>
chip_gen: v7x
topology: tpu7x:2x2x1
jax: 0.10.0
libtpu: 0.0.40
codegen_flags: <defaults>
</compile_context>

<pallas_src>
from enum import IntEnum
from functools import partial

import jax
import jax.numpy as jnp
from jax.experimental import pallas as pl
from jax.experimental.pallas import tpu as pltpu


class PoolingType(IntEnum):
    LAST = 0
    ALL = 1
    CLS = 2
    STEP = 3


def _round_up(x, m):
    return ((x + m - 1) // m) * m


def _pool_kernel(idx_ref, hs_hbm, out_ref, buf, sems, *,
                 group, hidden_true, normalize, softmax):
    # idx_ref : SMEM scalar-prefetch, flat token index per (padded) sequence.
    # hs_hbm  : raw HBM ref [total_tokens, Hpad] (memory_space=pl.ANY).
    # out_ref : (group, Hpad) pooled output block for this sequence group.
    # buf     : (2, group, Hpad) double-buffered VMEM gather scratch.
    # sems    : (2,) DMA semaphores, one per buffer slot (shared by the group).
    i = pl.program_id(0)
    n = pl.num_programs(0)
    slot = jax.lax.rem(i, 2)

    def issue(step, slot_):
        # Launch `group` concurrent row-gather DMAs HBM -> VMEM slot `slot_`,
        # all signaling the same per-slot semaphore.
        base = step * group
        for j in range(group):
            row = idx_ref[base + j]
            pltpu.make_async_copy(
                hs_hbm.at[pl.ds(row, 1), :],
                buf.at[slot_, pl.ds(j, 1), :],
                sems.at[slot_],
            ).start()

    # Prime the pipeline: the very first step issues its own group's DMAs.
    @pl.when(i == 0)
    def _():
        issue(0, 0)

    # Depth-2 prefetch: issue the NEXT group's DMAs into the other slot before
    # waiting on the current one, so their latency overlaps this step.
    @pl.when(i + 1 < n)
    def _():
        issue(i + 1, 1 - slot)

    # Single aggregate wait for the whole group: descriptor sized (group, Hpad)
    # built from the VMEM slot itself (byte count == sum of the started copies).
    pltpu.make_async_copy(buf.at[slot], buf.at[slot], sems.at[slot]).wait()

    x_raw = buf[slot]  # (group, Hpad)

    if not normalize and not softmax:
        # Pure gather: no f32 round-trip, just move the vregs out.
        out_ref[...] = x_raw
        return

    x = x_raw.astype(jnp.float32)  # f32 compute (v5e has no bf16 VPU/EUP)

    if normalize:
        # torch F.normalize(p=2, dim=1, eps=1e-12): x / max(||x||_2, eps)
        # == x * rsqrt(max(||x||^2, eps^2)); rsqrt runs on the EUP.
        # Lane-padded columns are zeros, so the sum of squares is unaffected.
        sq = jnp.sum(x * x, axis=-1, keepdims=True)
        x = x * jax.lax.rsqrt(jnp.maximum(sq, 1e-24))

    if softmax:
        if hidden_true != x.shape[-1]:
            # Mask padded lanes so they do not contribute to max / denominator.
            col = jax.lax.broadcasted_iota(jnp.int32, x.shape, 1)
            x = jnp.where(col < hidden_true, x, -jnp.inf)
        m = jnp.max(x, axis=-1, keepdims=True)
        e = jnp.exp(x - m)
        # Exact divide (review: classifier logits deserve full accuracy; the
        # cost is negligible at (group, Hpad)).
        x = e / jnp.sum(e, axis=-1, keepdims=True)

    out_ref[...] = x.astype(out_ref.dtype)


def pooler_forward(hidden_states, prompt_lens, *, pooling_type, normalize, softmax):
    """Pallas implementation of Pooler.forward for LAST / CLS pooling."""
    if hidden_states.ndim != 2 or hidden_states.shape[0] < 1:
        raise ValueError("hidden_states must be [total_tokens >= 1, hidden]")
    if prompt_lens.shape[0] < 1:
        raise ValueError("need at least one sequence")

    prompt_lens = prompt_lens.astype(jnp.int32)
    cum = jnp.cumsum(prompt_lens)

    if pooling_type == PoolingType.LAST:
        # last_token_flat_indices = cumsum(prompt_lens) - 1
        idx = cum - 1
    elif pooling_type == PoolingType.CLS:
        # first_token_flat_indices = [0, cumsum(prompt_lens)[:-1]...]
        idx = jnp.concatenate([jnp.zeros((1,), jnp.int32), cum[:-1]])
    else:
        raise NotImplementedError(
            "Only LAST and CLS pooling are implemented in the Pallas kernel.")

    num_seqs = prompt_lens.shape[0]
    hidden = hidden_states.shape[1]

    # Rows gathered per grid step: at least the native sublane packing for the
    # dtype, up to 64 rows, adapted to the batch size (review feedback).
    itemsize = jnp.dtype(hidden_states.dtype).itemsize
    packing = {4: 8, 2: 16, 1: 32}.get(itemsize, 8)
    group = min(64, _round_up(num_seqs, packing))

    num_seqs_pad = _round_up(num_seqs, group)

    # Lane-pad hidden to a multiple of 128 so output stores are unmasked full
    # vst (no-op in the common aligned case). Padded columns are zeros.
    hidden_pad = _round_up(hidden, 128)
    hs = hidden_states
    if hidden_pad != hidden:
        hs = jnp.pad(hidden_states, ((0, 0), (0, hidden_pad - hidden)))

    # Pad index table with 0 (a valid row) so padded lanes issue safe DMAs.
    idx_pad = jnp.zeros((num_seqs_pad,), jnp.int32).at[:num_seqs].set(
        idx.astype(jnp.int32))

    kernel = partial(_pool_kernel, group=group, hidden_true=hidden,
                     normalize=normalize, softmax=softmax)

    out = pl.pallas_call(
        kernel,
        out_shape=jax.ShapeDtypeStruct((num_seqs_pad, hidden_pad),
                                       hidden_states.dtype),
        grid_spec=pltpu.PrefetchScalarGridSpec(
            num_scalar_prefetch=1,
            grid=(num_seqs_pad // group,),
            in_specs=[
                # Keep the token stream in HBM; the kernel gathers rows itself.
                pl.BlockSpec(memory_space=pl.ANY),
            ],
            out_specs=pl.BlockSpec((group, hidden_pad),
                                   lambda i, idx_ref: (i, 0)),
            scratch_shapes=[
                pltpu.VMEM((2, group, hidden_pad), hidden_states.dtype),
                pltpu.SemaphoreType.DMA((2,)),
            ],
        ),
        compiler_params=pltpu.CompilerParams(
            # "arbitrary": the double-buffered prefetch carries scratch state
            # across grid steps, so the axis must run sequentially.  This is
            # free on v5e/v6e (1 TC); on v7x it trades megacore sharding for
            # depth-2 DMA latency hiding, which dominates here.
            dimension_semantics=("arbitrary",)),
    )(idx_pad, hs)

    return out[:num_seqs, :hidden]


def _reference_pool(hidden_states, prompt_lens, *, pooling_type, normalize, softmax):
    cum = jnp.cumsum(prompt_lens.astype(jnp.int32))
    if pooling_type == PoolingType.LAST:
        idx = cum - 1
    else:  # CLS
        idx = jnp.concatenate([jnp.zeros((1,), jnp.int32), cum[:-1]])
    x = hidden_states[idx].astype(jnp.float32)
    if normalize:
        x = x / jnp.maximum(jnp.linalg.norm(x, axis=-1, keepdims=True), 1e-12)
    if softmax:
        x = jax.nn.softmax(x, axis=-1)
    return x.astype(hidden_states.dtype)


if __name__ == "__main__":
    key = jax.random.PRNGKey(0)

    # ---- Case 1: LAST + L2 normalize (typical embedding-model config) ----
    num_seqs = 3
    hidden = 256
    prompt_lens = jnp.array([3, 5, 4], dtype=jnp.int32)
    total_tokens = int(jnp.sum(prompt_lens))
    k1, k2, k3 = jax.random.split(key, 3)
    hidden_states = jax.random.normal(k1, (total_tokens, hidden), dtype=jnp.float32)

    out_last = pooler_forward(hidden_states, prompt_lens,
                              pooling_type=PoolingType.LAST,
                              normalize=True, softmax=False)
    out_last = jax.block_until_ready(out_last)
    ref_last = _reference_pool(hidden_states, prompt_lens,
                               pooling_type=PoolingType.LAST,
                               normalize=True, softmax=False)
    assert out_last.shape == (num_seqs, hidden)
    assert jnp.allclose(out_last, ref_last, atol=1e-4, rtol=1e-4), "normalize mismatch"

    # ---- Case 2: CLS + softmax (typical classifier config) ----
    out_cls = pooler_forward(hidden_states, prompt_lens,
                             pooling_type=PoolingType.CLS,
                             normalize=False, softmax=True)
    out_cls = jax.block_until_ready(out_cls)
    ref_cls = _reference_pool(hidden_states, prompt_lens,
                              pooling_type=PoolingType.CLS,
                              normalize=False, softmax=True)
    assert out_cls.shape == (num_seqs, hidden)
    assert jnp.allclose(out_cls, ref_cls, atol=1e-4, rtol=1e-3), "softmax mismatch"

    # ---- Case 3: LAST, plain gather, bf16 (no f32 round trip, packing=16) ----
    hs_bf16 = hidden_states.astype(jnp.bfloat16)
    out_plain = pooler_forward(hs_bf16, prompt_lens,
                               pooling_type=PoolingType.LAST,
                               normalize=False, softmax=False)
    out_plain = jax.block_until_ready(out_plain)
    ref_plain = hs_bf16[jnp.cumsum(prompt_lens) - 1]
    assert out_plain.shape == (num_seqs, hidden)
    assert jnp.array_equal(out_plain, ref_plain), "plain gather mismatch"

    # ---- Case 4: non-128-aligned hidden, CLS + softmax (lane-pad + mask) ----
    hidden4 = 160
    hs4 = jax.random.normal(k2, (total_tokens, hidden4), dtype=jnp.float32)
    out4 = pooler_forward(hs4, prompt_lens,
                          pooling_type=PoolingType.CLS,
                          normalize=False, softmax=True)
    out4 = jax.block_until_ready(out4)
    ref4 = _reference_pool(hs4, prompt_lens,
                           pooling_type=PoolingType.CLS,
                           normalize=False, softmax=True)
    assert out4.shape == (num_seqs, hidden4)
    assert jnp.allclose(out4, ref4, atol=1e-4, rtol=1e-3), "padded softmax mismatch"

    # ---- Case 5: larger batch -> multi-step grid, exercises cross-step prefetch ----
    ns5 = 80
    pl5 = 1 + (jnp.arange(ns5, dtype=jnp.int32) % 4)
    tt5 = int(jnp.sum(pl5))
    hs5 = jax.random.normal(k3, (tt5, 128), dtype=jnp.float32)
    out5 = pooler_forward(hs5, pl5,
                          pooling_type=PoolingType.LAST,
                          normalize=True, softmax=False)
    out5 = jax.block_until_ready(out5)
    ref5 = _reference_pool(hs5, pl5,
                           pooling_type=PoolingType.LAST,
                           normalize=True, softmax=False)
    assert out5.shape == (ns5, 128)
    assert jnp.allclose(out5, ref5, atol=1e-4, rtol=1e-4), "multi-step mismatch"

    print("KERNEL_OK")
</pallas_src>

<mosaic_0001>
module attributes {stable_mosaic.version = 11 : i64} {
  func.func @_pool_kernel(%arg0: i32, %arg1: memref<8xi32, #tpu.memory_space<smem>>, %arg2: memref<12x256xf32, #tpu.memory_space<any>>, %arg3: memref<8x256xf32, #tpu.memory_space<vmem>>, %arg4: memref<2x8x256xf32, #tpu.memory_space<vmem>>, %arg5: memref<2x!tpu.dma_semaphore, #tpu.memory_space<semaphore_mem>>) attributes {dimension_semantics = [#tpu.dimension_semantics<arbitrary>], iteration_bounds = array<i64: 1>, scalar_prefetch = 1 : i64, scratch_operands = 2 : i64, tpu.core_type = #tpu.core_type<tc>, window_params = [{}, {transform_indices = @transform_1, window_bounds = array<i64: 8, 256>}]} {
    %c2_i32 = arith.constant 2 : i32
    %0 = arith.remsi %arg0, %c2_i32 : i32
    %c0_i32 = arith.constant 0 : i32
    %1 = arith.cmpi eq, %arg0, %c0_i32 : i32
    %2 = arith.extui %1 : i1 to i32
    %c0_i32_0 = arith.constant 0 : i32
    %3 = arith.cmpi ne, %2, %c0_i32_0 : i32
    scf.if %3 {
      %c0_11 = arith.constant 0 : index
      %26 = memref.load %arg1[%c0_11] : memref<8xi32, #tpu.memory_space<smem>>
      %c0_i32_12 = arith.constant 0 : i32
      %c0_i32_13 = arith.constant 0 : i32
      %c0_i32_14 = arith.constant 0 : i32
      %27 = tpu.memref_slice %arg2[%26, %c0_i32_14] : memref<12x256xf32, #tpu.memory_space<any>> -> memref<1x256xf32, #tpu.memory_space<any>>
      %c0_i32_15 = arith.constant 0 : i32
      %c0_i32_16 = arith.constant 0 : i32
      %28 = tpu.memref_slice %arg4[%c0_i32_12, %c0_i32_15, %c0_i32_16] : memref<2x8x256xf32, #tpu.memory_space<vmem>> -> memref<1x1x256xf32, #tpu.memory_space<vmem>>
      %29 = tpu.memref_squeeze %28 : memref<1x1x256xf32, #tpu.memory_space<vmem>> -> memref<1x256xf32, #tpu.memory_space<vmem>>
      %30 = tpu.memref_slice %arg5[%c0_i32_13] : memref<2x!tpu.dma_semaphore, #tpu.memory_space<semaphore_mem>> -> memref<1x!tpu.dma_semaphore, #tpu.memory_space<semaphore_mem>>
      %31 = tpu.memref_squeeze %30 : memref<1x!tpu.dma_semaphore, #tpu.memory_space<semaphore_mem>> -> memref<!tpu.dma_semaphore, #tpu.memory_space<semaphore_mem>>
      tpu.enqueue_dma source(%27 : memref<1x256xf32, #tpu.memory_space<any>>) target(%29 : memref<1x256xf32, #tpu.memory_space<vmem>>) target_semaphore(%31 : memref<!tpu.dma_semaphore, #tpu.memory_space<semaphore_mem>>)
      %c1 = arith.constant 1 : index
      %32 = memref.load %arg1[%c1] : memref<8xi32, #tpu.memory_space<smem>>
      %c0_i32_17 = arith.constant 0 : i32
      %c0_i32_18 = arith.constant 0 : i32
      %c0_i32_19 = arith.constant 0 : i32
      %33 = tpu.memref_slice %arg2[%32, %c0_i32_19] : memref<12x256xf32, #tpu.memory_space<any>> -> memref<1x256xf32, #tpu.memory_space<any>>
      %c1_i32_20 = arith.constant 1 : i32
      %c0_i32_21 = arith.constant 0 : i32
      %34 = tpu.memref_slice %arg4[%c0_i32_17, %c1_i32_20, %c0_i32_21] : memref<2x8x256xf32, #tpu.memory_space<vmem>> -> memref<1x1x256xf32, #tpu.memory_space<vmem>>
      %35 = tpu.memref_squeeze %34 : memref<1x1x256xf32, #tpu.memory_space<vmem>> -> memref<1x256xf32, #tpu.memory_space<vmem>>
      %36 = tpu.memref_slice %arg5[%c0_i32_18] : memref<2x!tpu.dma_semaphore, #tpu.memory_space<semaphore_mem>> -> memref<1x!tpu.dma_semaphore, #tpu.memory_space<semaphore_mem>>
      %37 = tpu.memref_squeeze %36 : memref<1x!tpu.dma_semaphore, #tpu.memory_space<semaphore_mem>> -> memref<!tpu.dma_semaphore, #tpu.memory_space<semaphore_mem>>
      tpu.enqueue_dma source(%33 : memref<1x256xf32, #tpu.memory_space<any>>) target(%35 : memref<1x256xf32, #tpu.memory_space<vmem>>) target_semaphore(%37 : memref<!tpu.dma_semaphore, #tpu.memory_space<semaphore_mem>>)
      %c2 = arith.constant 2 : index
      %38 = memref.load %arg1[%c2] : memref<8xi32, #tpu.memory_space<smem>>
      %c0_i32_22 = arith.constant 0 : i32
      %c0_i32_23 = arith.constant 0 : i32
      %c0_i32_24 = arith.constant 0 : i32
      %39 = tpu.memref_slice %arg2[%38, %c0_i32_24] : memref<12x256xf32, #tpu.memory_space<any>> -> memref<1x256xf32, #tpu.memory_space<any>>
      %c2_i32_25 = arith.constant 2 : i32
      %c0_i32_26 = arith.constant 0 : i32
      %40 = tpu.memref_slice %arg4[%c0_i32_22, %c2_i32_25, %c0_i32_26] : memref<2x8x256xf32, #tpu.memory_space<vmem>> -> memref<1x1x256xf32, #tpu.memory_space<vmem>>
      %41 = tpu.memref_squeeze %40 : memref<1x1x256xf32, #tpu.memory_space<vmem>> -> memref<1x256xf32, #tpu.memory_space<vmem>>
      %42 = tpu.memref_slice %arg5[%c0_i32_23] : memref<2x!tpu.dma_semaphore, #tpu.memory_space<semaphore_mem>> -> memref<1x!tpu.dma_semaphore, #tpu.memory_space<semaphore_mem>>
      %43 = tpu.memref_squeeze %42 : memref<1x!tpu.dma_semaphore, #tpu.memory_space<semaphore_mem>> -> memref<!tpu.dma_semaphore, #tpu.memory_space<semaphore_mem>>
      tpu.enqueue_dma source(%39 : memref<1x256xf32, #tpu.memory_space<any>>) target(%41 : memref<1x256xf32, #tpu.memory_space<vmem>>) target_semaphore(%43 : memref<!tpu.dma_semaphore, #tpu.memory_space<semaphore_mem>>)
      %c3 = arith.constant 3 : index
      %44 = memref.load %arg1[%c3] : memref<8xi32, #tpu.memory_space<smem>>
      %c0_i32_27 = arith.constant 0 : i32
      %c0_i32_28 = arith.constant 0 : i32
      %c0_i32_29 = arith.constant 0 : i32
      %45 = tpu.memref_slice %arg2[%44, %c0_i32_29] : memref<12x256xf32, #tpu.memory_space<any>> -> memref<1x256xf32, #tpu.memory_space<any>>
      %c3_i32 = arith.constant 3 : i32
      %c0_i32_30 = arith.constant 0 : i32
      %46 = tpu.memref_slice %arg4[%c0_i32_27, %c3_i32, %c0_i32_30] : memref<2x8x256xf32, #tpu.memory_space<vmem>> -> memref<1x1x256xf32, #tpu.memory_space<vmem>>
      %47 = tpu.memref_squeeze %46 : memref<1x1x256xf32, #tpu.memory_space<vmem>> -> memref<1x256xf32, #tpu.memory_space<vmem>>
      %48 = tpu.memref_slice %arg5[%c0_i32_28] : memref<2x!tpu.dma_semaphore, #tpu.memory_space<semaphore_mem>> -> memref<1x!tpu.dma_semaphore, #tpu.memory_space<semaphore_mem>>
      %49 = tpu.memref_squeeze %48 : memref<1x!tpu.dma_semaphore, #tpu.memory_space<semaphore_mem>> -> memref<!tpu.dma_semaphore, #tpu.memory_space<semaphore_mem>>
      tpu.enqueue_dma source(%45 : memref<1x256xf32, #tpu.memory_space<any>>) target(%47 : memref<1x256xf32, #tpu.memory_space<vmem>>) target_semaphore(%49 : memref<!tpu.dma_semaphore, #tpu.memory_space<semaphore_mem>>)
      %c4 = arith.constant 4 : index
      %50 = memref.load %arg1[%c4] : memref<8xi32, #tpu.memory_space<smem>>
      %c0_i32_31 = arith.constant 0 : i32
      %c0_i32_32 = arith.constant 0 : i32
      %c0_i32_33 = arith.constant 0 : i32
      %51 = tpu.memref_slice %arg2[%50, %c0_i32_33] : memref<12x256xf32, #tpu.memory_space<any>> -> memref<1x256xf32, #tpu.memory_space<any>>
      %c4_i32 = arith.constant 4 : i32
      %c0_i32_34 = arith.constant 0 : i32
      %52 = tpu.memref_slice %arg4[%c0_i32_31, %c4_i32, %c0_i32_34] : memref<2x8x256xf32, #tpu.memory_space<vmem>> -> memref<1x1x256xf32, #tpu.memory_space<vmem>>
      %53 = tpu.memref_squeeze %52 : memref<1x1x256xf32, #tpu.memory_space<vmem>> -> memref<1x256xf32, #tpu.memory_space<vmem>>
      %54 = tpu.memref_slice %arg5[%c0_i32_32] : memref<2x!tpu.dma_semaphore, #tpu.memory_space<semaphore_mem>> -> memref<1x!tpu.dma_semaphore, #tpu.memory_space<semaphore_mem>>
      %55 = tpu.memref_squeeze %54 : memref<1x!tpu.dma_semaphore, #tpu.memory_space<semaphore_mem>> -> memref<!tpu.dma_semaphore, #tpu.memory_space<semaphore_mem>>
      tpu.enqueue_dma source(%51 : memref<1x256xf32, #tpu.memory_space<any>>) target(%53 : memref<1x256xf32, #tpu.memory_space<vmem>>) target_semaphore(%55 : memref<!tpu.dma_semaphore, #tpu.memory_space<semaphore_mem>>)
      %c5 = arith.constant 5 : index
      %56 = memref.load %arg1[%c5] : memref<8xi32, #tpu.memory_space<smem>>
      %c0_i32_35 = arith.constant 0 : i32
      %c0_i32_36 = arith.constant 0 : i32
      %c0_i32_37 = arith.constant 0 : i32
      %57 = tpu.memref_slice %arg2[%56, %c0_i32_37] : memref<12x256xf32, #tpu.memory_space<any>> -> memref<1x256xf32, #tpu.memory_space<any>>
      %c5_i32 = arith.constant 5 : i32
      %c0_i32_38 = arith.constant 0 : i32
      %58 = tpu.memref_slice %arg4[%c0_i32_35, %c5_i32, %c0_i32_38] : memref<2x8x256xf32, #tpu.memory_space<vmem>> -> memref<1x1x256xf32, #tpu.memory_space<vmem>>
      %59 = tpu.memref_squeeze %58 : memref<1x1x256xf32, #tpu.memory_space<vmem>> -> memref<1x256xf32, #tpu.memory_space<vmem>>
      %60 = tpu.memref_slice %arg5[%c0_i32_36] : memref<2x!tpu.dma_semaphore, #tpu.memory_space<semaphore_mem>> -> memref<1x!tpu.dma_semaphore, #tpu.memory_space<semaphore_mem>>
      %61 = tpu.memref_squeeze %60 : memref<1x!tpu.dma_semaphore, #tpu.memory_space<semaphore_mem>> -> memref<!tpu.dma_semaphore, #tpu.memory_space<semaphore_mem>>
      tpu.enqueue_dma source(%57 : memref<1x256xf32, #tpu.memory_space<any>>) target(%59 : memref<1x256xf32, #tpu.memory_space<vmem>>) target_semaphore(%61 : memref<!tpu.dma_semaphore, #tpu.memory_space<semaphore_mem>>)
      %c6 = arith.constant 6 : index
      %62 = memref.load %arg1[%c6] : memref<8xi32, #tpu.memory_space<smem>>
      %c0_i32_39 = arith.constant 0 : i32
      %c0_i32_40 = arith.constant 0 : i32
      %c0_i32_41 = arith.constant 0 : i32
      %63 = tpu.memref_slice %arg2[%62, %c0_i32_41] : memref<12x256xf32, #tpu.memory_space<any>> -> memref<1x256xf32, #tpu.memory_space<any>>
      %c6_i32 = arith.constant 6 : i32
      %c0_i32_42 = arith.constant 0 : i32
      %64 = tpu.memref_slice %arg4[%c0_i32_39, %c6_i32, %c0_i32_42] : memref<2x8x256xf32, #tpu.memory_space<vmem>> -> memref<1x1x256xf32, #tpu.memory_space<vmem>>
      %65 = tpu.memref_squeeze %64 : memref<1x1x256xf32, #tpu.memory_space<vmem>> -> memref<1x256xf32, #tpu.memory_space<vmem>>
      %66 = tpu.memref_slice %arg5[%c0_i32_40] : memref<2x!tpu.dma_semaphore, #tpu.memory_space<semaphore_mem>> -> memref<1x!tpu.dma_semaphore, #tpu.memory_space<semaphore_mem>>
      %67 = tpu.memref_squeeze %66 : memref<1x!tpu.dma_semaphore, #tpu.memory_space<semaphore_mem>> -> memref<!tpu.dma_semaphore, #tpu.memory_space<semaphore_mem>>
      tpu.enqueue_dma source(%63 : memref<1x256xf32, #tpu.memory_space<any>>) target(%65 : memref<1x256xf32, #tpu.memory_space<vmem>>) target_semaphore(%67 : memref<!tpu.dma_semaphore, #tpu.memory_space<semaphore_mem>>)
      %c7 = arith.constant 7 : index
      %68 = memref.load %arg1[%c7] : memref<8xi32, #tpu.memory_space<smem>>
      %c0_i32_43 = arith.constant 0 : i32
      %c0_i32_44 = arith.constant 0 : i32
      %c0_i32_45 = arith.constant 0 : i32
      %69 = tpu.memref_slice %arg2[%68, %c0_i32_45] : memref<12x256xf32, #tpu.memory_space<any>> -> memref<1x256xf32, #tpu.memory_space<any>>
      %c7_i32 = arith.constant 7 : i32
      %c0_i32_46 = arith.constant 0 : i32
      %70 = tpu.memref_slice %arg4[%c0_i32_43, %c7_i32, %c0_i32_46] : memref<2x8x256xf32, #tpu.memory_space<vmem>> -> memref<1x1x256xf32, #tpu.memory_space<vmem>>
      %71 = tpu.memref_squeeze %70 : memref<1x1x256xf32, #tpu.memory_space<vmem>> -> memref<1x256xf32, #tpu.memory_space<vmem>>
      %72 = tpu.memref_slice %arg5[%c0_i32_44] : memref<2x!tpu.dma_semaphore, #tpu.memory_space<semaphore_mem>> -> memref<1x!tpu.dma_semaphore, #tpu.memory_space<semaphore_mem>>
      %73 = tpu.memref_squeeze %72 : memref<1x!tpu.dma_semaphore, #tpu.memory_space<semaphore_mem>> -> memref<!tpu.dma_semaphore, #tpu.memory_space<semaphore_mem>>
      tpu.enqueue_dma source(%69 : memref<1x256xf32, #tpu.memory_space<any>>) target(%71 : memref<1x256xf32, #tpu.memory_space<vmem>>) target_semaphore(%73 : memref<!tpu.dma_semaphore, #tpu.memory_space<semaphore_mem>>)
    } else {
    }
    %c1_i32 = arith.constant 1 : i32
    %4 = arith.addi %arg0, %c1_i32 : i32
    %c1_i32_1 = arith.constant 1 : i32
    %5 = arith.cmpi slt, %4, %c1_i32_1 : i32
    %6 = arith.extui %5 : i1 to i32
    %c0_i32_2 = arith.constant 0 : i32
    %7 = arith.cmpi ne, %6, %c0_i32_2 : i32
    scf.if %7 {
      %c1_i32_11 = arith.constant 1 : i32
      %26 = arith.addi %arg0, %c1_i32_11 : i32
      %c1_i32_12 = arith.constant 1 : i32
      %27 = arith.subi %c1_i32_12, %0 : i32
      %c8_i32 = arith.constant 8 : i32
      %28 = arith.muli %26, %c8_i32 : i32
      %c0_i32_13 = arith.constant 0 : i32
      %29 = arith.addi %28, %c0_i32_13 : i32
      %30 = arith.index_cast %29 : i32 to index
      %31 = memref.load %arg1[%30] : memref<8xi32, #tpu.memory_space<smem>>
      %c0_i32_14 = arith.constant 0 : i32
      %32 = tpu.memref_slice %arg2[%31, %c0_i32_14] : memref<12x256xf32, #tpu.memory_space<any>> -> memref<1x256xf32, #tpu.memory_space<any>>
      %c0_i32_15 = arith.constant 0 : i32
      %c0_i32_16 = arith.constant 0 : i32
      %33 = tpu.memref_slice %arg4[%27, %c0_i32_15, %c0_i32_16] : memref<2x8x256xf32, #tpu.memory_space<vmem>> -> memref<1x1x256xf32, #tpu.memory_space<vmem>>
      %34 = tpu.memref_squeeze %33 : memref<1x1x256xf32, #tpu.memory_space<vmem>> -> memref<1x256xf32, #tpu.memory_space<vmem>>
      %35 = tpu.memref_slice %arg5[%27] : memref<2x!tpu.dma_semaphore, #tpu.memory_space<semaphore_mem>> -> memref<1x!tpu.dma_semaphore, #tpu.memory_space<semaphore_mem>>
      %36 = tpu.memref_squeeze %35 : memref<1x!tpu.dma_semaphore, #tpu.memory_space<semaphore_mem>> -> memref<!tpu.dma_semaphore, #tpu.memory_space<semaphore_mem>>
      tpu.enqueue_dma source(%32 : memref<1x256xf32, #tpu.memory_space<any>>) target(%34 : memref<1x256xf32, #tpu.memory_space<vmem>>) target_semaphore(%36 : memref<!tpu.dma_semaphore, #tpu.memory_space<semaphore_mem>>)
      %c1_i32_17 = arith.constant 1 : i32
      %37 = arith.addi %28, %c1_i32_17 : i32
      %38 = arith.index_cast %37 : i32 to index
      %39 = memref.load %arg1[%38] : memref<8xi32, #tpu.memory_space<smem>>
      %c0_i32_18 = arith.constant 0 : i32
      %40 = tpu.memref_slice %arg2[%39, %c0_i32_18] : memref<12x256xf32, #tpu.memory_space<any>> -> memref<1x256xf32, #tpu.memory_space<any>>
      %c1_i32_19 = arith.constant 1 : i32
      %c0_i32_20 = arith.constant 0 : i32
      %41 = tpu.memref_slice %arg4[%27, %c1_i32_19, %c0_i32_20] : memref<2x8x256xf32, #tpu.memory_space<vmem>> -> memref<1x1x256xf32, #tpu.memory_space<vmem>>
      %42 = tpu.memref_squeeze %41 : memref<1x1x256xf32, #tpu.memory_space<vmem>> -> memref<1x256xf32, #tpu.memory_space<vmem>>
      %43 = tpu.memref_slice %arg5[%27] : memref<2x!tpu.dma_semaphore, #tpu.memory_space<semaphore_mem>> -> memref<1x!tpu.dma_semaphore, #tpu.memory_space<semaphore_mem>>
      %44 = tpu.memref_squeeze %43 : memref<1x!tpu.dma_semaphore, #tpu.memory_space<semaphore_mem>> -> memref<!tpu.dma_semaphore, #tpu.memory_space<semaphore_mem>>
      tpu.enqueue_dma source(%40 : memref<1x256xf32, #tpu.memory_space<any>>) target(%42 : memref<1x256xf32, #tpu.memory_space<vmem>>) target_semaphore(%44 : memref<!tpu.dma_semaphore, #tpu.memory_space<semaphore_mem>>)
      %c2_i32_21 = arith.constant 2 : i32
      %45 = arith.addi %28, %c2_i32_21 : i32
      %46 = arith.index_cast %45 : i32 to index
      %47 = memref.load %arg1[%46] : memref<8xi32, #tpu.memory_space<smem>>
      %c0_i32_22 = arith.constant 0 : i32
      %48 = tpu.memref_slice %arg2[%47, %c0_i32_22] : memref<12x256xf32, #tpu.memory_space<any>> -> memref<1x256xf32, #tpu.memory_space<any>>
      %c2_i32_23 = arith.constant 2 : i32
      %c0_i32_24 = arith.constant 0 : i32
      %49 = tpu.memref_slice %arg4[%27, %c2_i32_23, %c0_i32_24] : memref<2x8x256xf32, #tpu.memory_space<vmem>> -> memref<1x1x256xf32, #tpu.memory_space<vmem>>
      %50 = tpu.memref_squeeze %49 : memref<1x1x256xf32, #tpu.memory_space<vmem>> -> memref<1x256xf32, #tpu.memory_space<vmem>>
      %51 = tpu.memref_slice %arg5[%27] : memref<2x!tpu.dma_semaphore, #tpu.memory_space<semaphore_mem>> -> memref<1x!tpu.dma_semaphore, #tpu.memory_space<semaphore_mem>>
      %52 = tpu.memref_squeeze %51 : memref<1x!tpu.dma_semaphore, #tpu.memory_space<semaphore_mem>> -> memref<!tpu.dma_semaphore, #tpu.memory_space<semaphore_mem>>
      tpu.enqueue_dma source(%48 : memref<1x256xf32, #tpu.memory_space<any>>) target(%50 : memref<1x256xf32, #tpu.memory_space<vmem>>) target_semaphore(%52 : memref<!tpu.dma_semaphore, #tpu.memory_space<semaphore_mem>>)
      %c3_i32 = arith.constant 3 : i32
      %53 = arith.addi %28, %c3_i32 : i32
      %54 = arith.index_cast %53 : i32 to index
      %55 = memref.load %arg1[%54] : memref<8xi32, #tpu.memory_space<smem>>
      %c0_i32_25 = arith.constant 0 : i32
      %56 = tpu.memref_slice %arg2[%55, %c0_i32_25] : memref<12x256xf32, #tpu.memory_space<any>> -> memref<1x256xf32, #tpu.memory_space<any>>
      %c3_i32_26 = arith.constant 3 : i32
      %c0_i32_27 = arith.constant 0 : i32
      %57 = tpu.memref_slice %arg4[%27, %c3_i32_26, %c0_i32_27] : memref<2x8x256xf32, #tpu.memory_space<vmem>> -> memref<1x1x256xf32, #tpu.memory_space<vmem>>
      %58 = tpu.memref_squeeze %57 : memref<1x1x256xf32, #tpu.memory_space<vmem>> -> memref<1x256xf32, #tpu.memory_space<vmem>>
      %59 = tpu.memref_slice %arg5[%27] : memref<2x!tpu.dma_semaphore, #tpu.memory_space<semaphore_mem>> -> memref<1x!tpu.dma_semaphore, #tpu.memory_space<semaphore_mem>>
      %60 = tpu.memref_squeeze %59 : memref<1x!tpu.dma_semaphore, #tpu.memory_space<semaphore_mem>> -> memref<!tpu.dma_semaphore, #tpu.memory_space<semaphore_mem>>
      tpu.enqueue_dma source(%56 : memref<1x256xf32, #tpu.memory_space<any>>) target(%58 : memref<1x256xf32, #tpu.memory_space<vmem>>) target_semaphore(%60 : memref<!tpu.dma_semaphore, #tpu.memory_space<semaphore_mem>>)
      %c4_i32 = arith.constant 4 : i32
      %61 = arith.addi %28, %c4_i32 : i32
      %62 = arith.index_cast %61 : i32 to index
      %63 = memref.load %arg1[%62] : memref<8xi32, #tpu.memory_space<smem>>
      %c0_i32_28 = arith.constant 0 : i32
      %64 = tpu.memref_slice %arg2[%63, %c0_i32_28] : memref<12x256xf32, #tpu.memory_space<any>> -> memref<1x256xf32, #tpu.memory_space<any>>
      %c4_i32_29 = arith.constant 4 : i32
      %c0_i32_30 = arith.constant 0 : i32
      %65 = tpu.memref_slice %arg4[%27, %c4_i32_29, %c0_i32_30] : memref<2x8x256xf32, #tpu.memory_space<vmem>> -> memref<1x1x256xf32, #tpu.memory_space<vmem>>
      %66 = tpu.memref_squeeze %65 : memref<1x1x256xf32, #tpu.memory_space<vmem>> -> memref<1x256xf32, #tpu.memory_space<vmem>>
      %67 = tpu.memref_slice %arg5[%27] : memref<2x!tpu.dma_semaphore, #tpu.memory_space<semaphore_mem>> -> memref<1x!tpu.dma_semaphore, #tpu.memory_space<semaphore_mem>>
      %68 = tpu.memref_squeeze %67 : memref<1x!tpu.dma_semaphore, #tpu.memory_space<semaphore_mem>> -> memref<!tpu.dma_semaphore, #tpu.memory_space<semaphore_mem>>
      tpu.enqueue_dma source(%64 : memref<1x256xf32, #tpu.memory_space<any>>) target(%66 : memref<1x256xf32, #tpu.memory_space<vmem>>) target_semaphore(%68 : memref<!tpu.dma_semaphore, #tpu.memory_space<semaphore_mem>>)
      %c5_i32 = arith.constant 5 : i32
      %69 = arith.addi %28, %c5_i32 : i32
      %70 = arith.index_cast %69 : i32 to index
      %71 = memref.load %arg1[%70] : memref<8xi32, #tpu.memory_space<smem>>
      %c0_i32_31 = arith.constant 0 : i32
      %72 = tpu.memref_slice %arg2[%71, %c0_i32_31] : memref<12x256xf32, #tpu.memory_space<any>> -> memref<1x256xf32, #tpu.memory_space<any>>
      %c5_i32_32 = arith.constant 5 : i32
      %c0_i32_33 = arith.constant 0 : i32
      %73 = tpu.memref_slice %arg4[%27, %c5_i32_32, %c0_i32_33] : memref<2x8x256xf32, #tpu.memory_space<vmem>> -> memref<1x1x256xf32, #tpu.memory_space<vmem>>
      %74 = tpu.memref_squeeze %73 : memref<1x1x256xf32, #tpu.memory_space<vmem>> -> memref<1x256xf32, #tpu.memory_space<vmem>>
      %75 = tpu.memref_slice %arg5[%27] : memref<2x!tpu.dma_semaphore, #tpu.memory_space<semaphore_mem>> -> memref<1x!tpu.dma_semaphore, #tpu.memory_space<semaphore_mem>>
      %76 = tpu.memref_squeeze %75 : memref<1x!tpu.dma_semaphore, #tpu.memory_space<semaphore_mem>> -> memref<!tpu.dma_semaphore, #tpu.memory_space<semaphore_mem>>
      tpu.enqueue_dma source(%72 : memref<1x256xf32, #tpu.memory_space<any>>) target(%74 : memref<1x256xf32, #tpu.memory_space<vmem>>) target_semaphore(%76 : memref<!tpu.dma_semaphore, #tpu.memory_space<semaphore_mem>>)
      %c6_i32 = arith.constant 6 : i32
      %77 = arith.addi %28, %c6_i32 : i32
      %78 = arith.index_cast %77 : i32 to index
      %79 = memref.load %arg1[%78] : memref<8xi32, #tpu.memory_space<smem>>
      %c0_i32_34 = arith.constant 0 : i32
      %80 = tpu.memref_slice %arg2[%79, %c0_i32_34] : memref<12x256xf32, #tpu.memory_space<any>> -> memref<1x256xf32, #tpu.memory_space<any>>
      %c6_i32_35 = arith.constant 6 : i32
      %c0_i32_36 = arith.constant 0 : i32
      %81 = tpu.memref_slice %arg4[%27, %c6_i32_35, %c0_i32_36] : memref<2x8x256xf32, #tpu.memory_space<vmem>> -> memref<1x1x256xf32, #tpu.memory_space<vmem>>
      %82 = tpu.memref_squeeze %81 : memref<1x1x256xf32, #tpu.memory_space<vmem>> -> memref<1x256xf32, #tpu.memory_space<vmem>>
      %83 = tpu.memref_slice %arg5[%27] : memref<2x!tpu.dma_semaphore, #tpu.memory_space<semaphore_mem>> -> memref<1x!tpu.dma_semaphore, #tpu.memory_space<semaphore_mem>>
      %84 = tpu.memref_squeeze %83 : memref<1x!tpu.dma_semaphore, #tpu.memory_space<semaphore_mem>> -> memref<!tpu.dma_semaphore, #tpu.memory_space<semaphore_mem>>
      tpu.enqueue_dma source(%80 : memref<1x256xf32, #tpu.memory_space<any>>) target(%82 : memref<1x256xf32, #tpu.memory_space<vmem>>) target_semaphore(%84 : memref<!tpu.dma_semaphore, #tpu.memory_space<semaphore_mem>>)
      %c7_i32 = arith.constant 7 : i32
      %85 = arith.addi %28, %c7_i32 : i32
      %86 = arith.index_cast %85 : i32 to index
      %87 = memref.load %arg1[%86] : memref<8xi32, #tpu.memory_space<smem>>
      %c0_i32_37 = arith.constant 0 : i32
      %88 = tpu.memref_slice %arg2[%87, %c0_i32_37] : memref<12x256xf32, #tpu.memory_space<any>> -> memref<1x256xf32, #tpu.memory_space<any>>
      %c7_i32_38 = arith.constant 7 : i32
      %c0_i32_39 = arith.constant 0 : i32
      %89 = tpu.memref_slice %arg4[%27, %c7_i32_38, %c0_i32_39] : memref<2x8x256xf32, #tpu.memory_space<vmem>> -> memref<1x1x256xf32, #tpu.memory_space<vmem>>
      %90 = tpu.memref_squeeze %89 : memref<1x1x256xf32, #tpu.memory_space<vmem>> -> memref<1x256xf32, #tpu.memory_space<vmem>>
      %91 = tpu.memref_slice %arg5[%27] : memref<2x!tpu.dma_semaphore, #tpu.memory_space<semaphore_mem>> -> memref<1x!tpu.dma_semaphore, #tpu.memory_space<semaphore_mem>>
      %92 = tpu.memref_squeeze %91 : memref<1x!tpu.dma_semaphore, #tpu.memory_space<semaphore_mem>> -> memref<!tpu.dma_semaphore, #tpu.memory_space<semaphore_mem>>
      tpu.enqueue_dma source(%88 : memref<1x256xf32, #tpu.memory_space<any>>) target(%90 : memref<1x256xf32, #tpu.memory_space<vmem>>) target_semaphore(%92 : memref<!tpu.dma_semaphore, #tpu.memory_space<semaphore_mem>>)
    } else {
    }
    %c0_i32_3 = arith.constant 0 : i32
    %c0_i32_4 = arith.constant 0 : i32
    %8 = tpu.memref_slice %arg4[%0, %c0_i32_3, %c0_i32_4] : memref<2x8x256xf32, #tpu.memory_space<vmem>> -> memref<1x8x256xf32, #tpu.memory_space<vmem>>
    %9 = tpu.memref_squeeze %8 : memref<1x8x256xf32, #tpu.memory_space<vmem>> -> memref<8x256xf32, #tpu.memory_space<vmem>>
    %c0_i32_5 = arith.constant 0 : i32
    %c0_i32_6 = arith.constant 0 : i32
    %10 = tpu.memref_slice %arg4[%0, %c0_i32_5, %c0_i32_6] : memref<2x8x256xf32, #tpu.memory_space<vmem>> -> memref<1x8x256xf32, #tpu.memory_space<vmem>>
    %11 = tpu.memref_squeeze %10 : memref<1x8x256xf32, #tpu.memory_space<vmem>> -> memref<8x256xf32, #tpu.memory_space<vmem>>
    %12 = tpu.memref_slice %arg5[%0] : memref<2x!tpu.dma_semaphore, #tpu.memory_space<semaphore_mem>> -> memref<1x!tpu.dma_semaphore, #tpu.memory_space<semaphore_mem>>
    %13 = tpu.memref_squeeze %12 : memref<1x!tpu.dma_semaphore, #tpu.memory_space<semaphore_mem>> -> memref<!tpu.dma_semaphore, #tpu.memory_space<semaphore_mem>>
    tpu.wait_dma2 semaphore(%13 : memref<!tpu.dma_semaphore, #tpu.memory_space<semaphore_mem>>) src(%9 : memref<8x256xf32, #tpu.memory_space<vmem>>) dst(%11 : memref<8x256xf32, #tpu.memory_space<vmem>>)
    %14 = arith.index_cast %0 : i32 to index
    %c0 = arith.constant 0 : index
    %c0_7 = arith.constant 0 : index
    %15 = vector.load %arg4[%14, %c0, %c0_7] : memref<2x8x256xf32, #tpu.memory_space<vmem>>, vector<1x8x256xf32>
    %16 = vector.shape_cast %15 : vector<1x8x256xf32> to vector<8x256xf32>
    %17 = arith.mulf %16, %16 : vector<8x256xf32>
    %cst = arith.constant dense<0.000000e+00> : vector<8xf32>
    %18 = vector.multi_reduction <add>, %17, %cst [1] : vector<8x256xf32> to vector<8xf32>
    %19 = vector.shape_cast %18 : vector<8xf32> to vector<8x1xf32>
    %cst_8 = arith.constant 1.000000e-24 : f32
    %20 = vector.broadcast %cst_8 : f32 to vector<8x1xf32>
    %21 = arith.maximumf %19, %20 : vector<8x1xf32>
    %22 = math.rsqrt %21 : vector<8x1xf32>
    %23 = vector.broadcast %22 : vector<8x1xf32> to vector<8x256xf32>
    %24 = arith.mulf %16, %23 : vector<8x256xf32>
    %c0_9 = arith.constant 0 : index
    %c0_10 = arith.constant 0 : index
    %25 = vector.load %arg3[%c0_9, %c0_10] : memref<8x256xf32, #tpu.memory_space<vmem>>, vector<8x256xf32>
    tpu.vector_store %arg3[%c0_9, %c0_10], %24 {strides = array<i32>} : memref<8x256xf32, #tpu.memory_space<vmem>>, vector<8x256xf32>,
    return
  }
  func.func @transform_1(%arg0: i32, %arg1: memref<8xi32, #tpu.memory_space<smem>>) -> (i32, i32) {
    %c0_i32 = arith.constant 0 : i32
    %c0_i32_0 = arith.constant 0 : i32
    return %arg0, %c0_i32 : i32, i32
  }
}

</mosaic_0001>

<llo_original>
// kernel: tpu_custom_call.1
$region0: #{tpu_custom_call.1}
  #allocation0 [shape = 'u32[]', space=smem, size = 0x4, offset = 0x4, fixed_abs, tag = 'smem constant byte address 0x4 - core index']
  #allocation1 [shape = 'u32[144,128]{1,0:T(1,128)}', space=vmem, size = 0x12000, scoped, tag = 'internal scratch']
  #allocation2 [shape = 'f32[2,8,256]{2,1,0:T(8,128)}', space=vmem, size = 0x4000, scoped, tag = 'scratch operand']
  #allocation3 [shape = 's32[2]{0}', space=sflag, size = 0x8, scoped, tag = 'scratch operand']
  #allocation4 [shape = 's32[1]{0}', space=sflag, size = 0x4, scoped, tag = 'scoped memory for tpu_custom_call.1']
  #allocation5 [shape = 'u8[512]{0}', space=smem, size = 0x200, scoped, tag = 'prefetched SMEM operand 0']
  #allocation8 [shape = 's32[]', space=sflag, size = 0x4, offset = 0, fixed_abs, tag = 'sflag constant byte address 0x0 - dummy sync flag']
  #allocation9 [shape = 's32[]', space=sflag, size = 0x4, offset = 0, fixed_abs, tag = 'sflag constant byte address 0x0 - dummy sync flag']
  #allocation10 [shape = 's32[]', space=sflag, size = 0x4, offset = 0, fixed_abs, tag = 'sflag constant byte address 0x0 - dummy sync flag']
  #allocation11 [shape = 's32[]', space=sflag, size = 0x4, offset = 0, fixed_abs, tag = 'sflag constant byte address 0x0 - dummy sync flag']
  #allocation12 [shape = 's32[]', space=sflag, size = 0x4, offset = 0, fixed_abs, tag = 'sflag constant byte address 0x0 - dummy sync flag']
  #allocation13 [shape = 's32[]', space=sflag, size = 0x4, offset = 0, fixed_abs, tag = 'sflag constant byte address 0x0 - dummy sync flag']
  #allocation14 [shape = 's32[]', space=sflag, size = 0x4, offset = 0, fixed_abs, tag = 'sflag constant byte address 0x0 - dummy sync flag']
  #allocation15 [shape = 's32[]', space=sflag, size = 0x4, offset = 0, fixed_abs, tag = 'sflag constant byte address 0x0 - dummy sync flag']
  #allocation16 [shape = 's32[]', space=sflag, size = 0x4, offset = 0, fixed_abs, tag = 'sflag constant byte address 0x0 - dummy sync flag']
  #allocation17 [shape = 's32[]', space=sflag, size = 0x4, offset = 0, fixed_abs, tag = 'sflag constant byte address 0x0 - dummy sync flag']
  #allocation18 [shape = 's32[]', space=sflag, size = 0x4, offset = 0, fixed_abs, tag = 'sflag constant byte address 0x0 - dummy sync flag']
  #allocation19 [shape = 's32[]', space=sflag, size = 0x4, offset = 0, fixed_abs, tag = 'sflag constant byte address 0x0 - dummy sync flag']
  #allocation20 [shape = 's32[]', space=sflag, size = 0x4, offset = 0, fixed_abs, tag = 'sflag constant byte address 0x0 - dummy sync flag']
  #allocation21 [shape = 's32[]', space=sflag, size = 0x4, offset = 0, fixed_abs, tag = 'sflag constant byte address 0x0 - dummy sync flag']
  #allocation22 [shape = 's32[]', space=sflag, size = 0x4, offset = 0, fixed_abs, tag = 'sflag constant byte address 0x0 - dummy sync flag']
  #allocation23 [shape = 's32[]', space=sflag, size = 0x4, offset = 0, fixed_abs, tag = 'sflag constant byte address 0x0 - dummy sync flag']
  %s0 = inlined_call_operand.hbm [shape: s32[8], index: 0, kind: input, shape index: {}]
  %s1 = inlined_call_operand.hbm [shape: f32[12,256], index: 1, kind: input, shape index: {}]
  %s2 = inlined_call_operand.hbm [shape: f32[8,256], index: 2, kind: output, shape index: {}]
  %s3 = sld [smem:[#allocation0]]
  $region18: #{tpu_custom_call.1} parent=0
    _
  %s5 = ssub.s32 1, %s3
  %s6 = scalar_select 0, %s5, %s3
  %8 = dma.hbm_to_smem %s0, 16, [#allocation5], [#allocation4]
  %9 = dma.done [#allocation4], 16
  %10 = sfence
  $region1: #{tpu_custom_call.1} parent=0
    #allocation6 [shape = 'u8[8192]{0}', space=vmem, size = 0x2000, scoped, tag = 'output window, operand 0, single buffered']
    #allocation7 [shape = 's32[1]{0}', space=sflag, size = 0x4, scoped, tag = 'scoped memory for tpu_custom_call.1']
    %11 = vsyncpa [#allocation7], 0
    %s12 = ssub.s32 0, 0
    %s13 = ssub.s32 0, 0
    %p14 = scmp.eq.s32.totalorder 0, 0
    // Predicated region
    $region2: #{tpu_custom_call.1} parent=1 // pred_check
      %p15 = pneg %p14
    $region3: #{tpu_custom_call.1} parent=1 // pred_check_branch
      %17 = sbr.rel (%p15) target = $region5
    $region4: #{tpu_custom_call.1} parent=1 // pred_region
      %s18 = sld [smem:[#allocation5]]
      %s19 = sshrl.u32 %s18, 3
      %s20 = sand.u32 %s18, 7
      %s21 = smul.u32 %s19, 16
      %s22 = sadd.s32 %s20, %s21
      %s23 = smul.addr %s22, 16
      %s24 = scalar_lea.hbm %s1, %s23
      %s26 = sshll.u32 [#allocation2], 4
      %s27 = int_to_ptr.vmem [resolvable:$true] %s26
      %29 = dma.hbm_to_vmem [thread:$0]  %s24, 32, %s27, [#allocation3], 128, 128, 1
      %s30 = sld [smem:[#allocation5 + $0x1]]
      %s31 = sshrl.u32 %s30, 3
      %s32 = sand.u32 %s30, 7
      %s33 = smul.u32 %s31, 16
      %s34 = sadd.s32 %s32, %s33
      %s35 = smul.addr %s34, 16
      %s36 = scalar_lea.hbm %s1, %s35
      %s37 = scalar_lea.vmem [#allocation2], 1
      %s39 = sshll.u32 %s37, 4
      %s40 = int_to_ptr.vmem [resolvable:$true] %s39
      %42 = dma.hbm_to_vmem [thread:$0]  %s36, 32, %s40, [#allocation3], 128, 128, 1
      %s43 = sld [smem:[#allocation5 + $0x2]]
      %s44 = sshrl.u32 %s43, 3
      %s45 = sand.u32 %s43, 7
      %s46 = smul.u32 %s44, 16
      %s47 = sadd.s32 %s45, %s46
      %s48 = smul.addr %s47, 16
      %s49 = scalar_lea.hbm %s1, %s48
      %s50 = scalar_lea.vmem [#allocation2], 2
      %s52 = sshll.u32 %s50, 4
      %s53 = int_to_ptr.vmem [resolvable:$true] %s52
      %55 = dma.hbm_to_vmem [thread:$0]  %s49, 32, %s53, [#allocation3], 128, 128, 1
      %s56 = sld [smem:[#allocation5 + $0x3]]
      %s57 = sshrl.u32 %s56, 3
      %s58 = sand.u32 %s56, 7
      %s59 = smul.u32 %s57, 16
      %s60 = sadd.s32 %s58, %s59
      %s61 = smul.addr %s60, 16
      %s62 = scalar_lea.hbm %s1, %s61
      %s63 = scalar_lea.vmem [#allocation2], 3
      %s65 = sshll.u32 %s63, 4
      %s66 = int_to_ptr.vmem [resolvable:$true] %s65
      %68 = dma.hbm_to_vmem [thread:$0]  %s62, 32, %s66, [#allocation3], 128, 128, 1
      %s69 = sld [smem:[#allocation5 + $0x4]]
      %s70 = sshrl.u32 %s69, 3
      %s71 = sand.u32 %s69, 7
      %s72 = smul.u32 %s70, 16
      %s73 = sadd.s32 %s71, %s72
      %s74 = smul.addr %s73, 16
      %s75 = scalar_lea.hbm %s1, %s74
      %s76 = scalar_lea.vmem [#allocation2], 4
      %s78 = sshll.u32 %s76, 4
      %s79 = int_to_ptr.vmem [resolvable:$true] %s78
      %81 = dma.hbm_to_vmem [thread:$0]  %s75, 32, %s79, [#allocation3], 128, 128, 1
      %s82 = sld [smem:[#allocation5 + $0x5]]
      %s83 = sshrl.u32 %s82, 3
      %s84 = sand.u32 %s82, 7
      %s85 = smul.u32 %s83, 16
      %s86 = sadd.s32 %s84, %s85
      %s87 = smul.addr %s86, 16
      %s88 = scalar_lea.hbm %s1, %s87
      %s89 = scalar_lea.vmem [#allocation2], 5
      %s91 = sshll.u32 %s89, 4
      %s92 = int_to_ptr.vmem [resolvable:$true] %s91
      %94 = dma.hbm_to_vmem [thread:$0]  %s88, 32, %s92, [#allocation3], 128, 128, 1
      %s95 = sld [smem:[#allocation5 + $0x6]]
      %s96 = sshrl.u32 %s95, 3
      %s97 = sand.u32 %s95, 7
      %s98 = smul.u32 %s96, 16
      %s99 = sadd.s32 %s97, %s98
      %s100 = smul.addr %s99, 16
      %s101 = scalar_lea.hbm %s1, %s100
      %s102 = scalar_lea.vmem [#allocation2], 6
      %s104 = sshll.u32 %s102, 4
      %s105 = int_to_ptr.vmem [resolvable:$true] %s104
      %107 = dma.hbm_to_vmem [thread:$0]  %s101, 32, %s105, [#allocation3], 128, 128, 1
      %s108 = sld [smem:[#allocation5 + $0x7]]
      %s109 = sshrl.u32 %s108, 3
      %s110 = sand.u32 %s108, 7
      %s111 = smul.u32 %s109, 16
      %s112 = sadd.s32 %s110, %s111
      %s113 = smul.addr %s112, 16
      %s114 = scalar_lea.hbm %s1, %s113
      %s115 = scalar_lea.vmem [#allocation2], 7
      %s117 = sshll.u32 %s115, 4
      %s118 = int_to_ptr.vmem [resolvable:$true] %s117
      %120 = dma.hbm_to_vmem [thread:$0]  %s114, 32, %s118, [#allocation3], 128, 128, 1
    $region5: #{tpu_custom_call.1} parent=1 // pred_fallthru
      _
    %s121 = sadd.s32 0, 1
    %p122 = scmp.lt.s32.totalorder %s121, 1
    // Predicated region
    $region6: #{tpu_custom_call.1} parent=1 // pred_check
      %p123 = pneg %p122
    $region7: #{tpu_custom_call.1} parent=1 // pred_check_branch
      %125 = sbr.rel (%p123) target = $region9
    $region8: #{tpu_custom_call.1} parent=1 // pred_region
      %s126 = ssub.s32 1, 0
      %s127 = smul.u32 %s121, 8
      %s128 = sld [smem:[#allocation5 + %s127]]
      %s129 = sshrl.u32 %s128, 3
      %s130 = sand.u32 %s128, 7
      %s131 = smul.u32 %s129, 16
      %s132 = sadd.s32 %s130, %s131
      %s133 = smul.addr %s132, 16
      %s134 = scalar_lea.hbm %s1, %s133
      %s135 = smul.u32 %s126, 16
      %s136 = scalar_lea.vmem [#allocation2], %s135
      %s137 = scalar_lea.sflag [#allocation3], %s126
      %s139 = sshll.u32 %s136, 4
      %s140 = int_to_ptr.vmem [resolvable:$true] %s139
      %142 = dma.hbm_to_vmem [thread:$0]  %s134, 32, %s140, %s137, 128, 128, 1
      %s143 = sadd.s32 %s127, 1
      %s144 = sld [smem:[#allocation5 + %s143]]
      %s145 = sshrl.u32 %s144, 3
      %s146 = sand.u32 %s144, 7
      %s147 = smul.u32 %s145, 16
      %s148 = sadd.s32 %s146, %s147
      %s149 = smul.addr %s148, 16
      %s150 = scalar_lea.hbm %s1, %s149
      %s151 = sadd.s32 1, %s135
      %s152 = scalar_lea.vmem [#allocation2], %s151
      %s154 = sshll.u32 %s152, 4
      %s155 = int_to_ptr.vmem [resolvable:$true] %s154
      %157 = dma.hbm_to_vmem [thread:$0]  %s150, 32, %s155, %s137, 128, 128, 1
      %s158 = sadd.s32 %s127, 2
      %s159 = sld [smem:[#allocation5 + %s158]]
      %s160 = sshrl.u32 %s159, 3
      %s161 = sand.u32 %s159, 7
      %s162 = smul.u32 %s160, 16
      %s163 = sadd.s32 %s161, %s162
      %s164 = smul.addr %s163, 16
      %s165 = scalar_lea.hbm %s1, %s164
      %s166 = sadd.s32 2, %s135
      %s167 = scalar_lea.vmem [#allocation2], %s166
      %s169 = sshll.u32 %s167, 4
      %s170 = int_to_ptr.vmem [resolvable:$true] %s169
      %172 = dma.hbm_to_vmem [thread:$0]  %s165, 32, %s170, %s137, 128, 128, 1
      %s173 = sadd.s32 %s127, 3
      %s174 = sld [smem:[#allocation5 + %s173]]
      %s175 = sshrl.u32 %s174, 3
      %s176 = sand.u32 %s174, 7
      %s177 = smul.u32 %s175, 16
      %s178 = sadd.s32 %s176, %s177
      %s179 = smul.addr %s178, 16
      %s180 = scalar_lea.hbm %s1, %s179
      %s181 = sadd.s32 3, %s135
      %s182 = scalar_lea.vmem [#allocation2], %s181
      %s184 = sshll.u32 %s182, 4
      %s185 = int_to_ptr.vmem [resolvable:$true] %s184
      %187 = dma.hbm_to_vmem [thread:$0]  %s180, 32, %s185, %s137, 128, 128, 1
      %s188 = sadd.s32 %s127, 4
      %s189 = sld [smem:[#allocation5 + %s188]]
      %s190 = sshrl.u32 %s189, 3
      %s191 = sand.u32 %s189, 7
      %s192 = smul.u32 %s190, 16
      %s193 = sadd.s32 %s191, %s192
      %s194 = smul.addr %s193, 16
      %s195 = scalar_lea.hbm %s1, %s194
      %s196 = sadd.s32 4, %s135
      %s197 = scalar_lea.vmem [#allocation2], %s196
      %s199 = sshll.u32 %s197, 4
      %s200 = int_to_ptr.vmem [resolvable:$true] %s199
      %202 = dma.hbm_to_vmem [thread:$0]  %s195, 32, %s200, %s137, 128, 128, 1
      %s203 = sadd.s32 %s127, 5
      %s204 = sld [smem:[#allocation5 + %s203]]
      %s205 = sshrl.u32 %s204, 3
      %s206 = sand.u32 %s204, 7
      %s207 = smul.u32 %s205, 16
      %s208 = sadd.s32 %s206, %s207
      %s209 = smul.addr %s208, 16
      %s210 = scalar_lea.hbm %s1, %s209
      %s211 = sadd.s32 5, %s135
      %s212 = scalar_lea.vmem [#allocation2], %s211
      %s214 = sshll.u32 %s212, 4
      %s215 = int_to_ptr.vmem [resolvable:$true] %s214
      %217 = dma.hbm_to_vmem [thread:$0]  %s210, 32, %s215, %s137, 128, 128, 1
      %s218 = sadd.s32 %s127, 6
      %s219 = sld [smem:[#allocation5 + %s218]]
      %s220 = sshrl.u32 %s219, 3
      %s221 = sand.u32 %s219, 7
      %s222 = smul.u32 %s220, 16
      %s223 = sadd.s32 %s221, %s222
      %s224 = smul.addr %s223, 16
      %s225 = scalar_lea.hbm %s1, %s224
      %s226 = sadd.s32 6, %s135
      %s227 = scalar_lea.vmem [#allocation2], %s226
      %s229 = sshll.u32 %s227, 4
      %s230 = int_to_ptr.vmem [resolvable:$true] %s229
      %232 = dma.hbm_to_vmem [thread:$0]  %s225, 32, %s230, %s137, 128, 128, 1
      %s233 = sadd.s32 %s127, 7
      %s234 = sld [smem:[#allocation5 + %s233]]
      %s235 = sshrl.u32 %s234, 3
      %s236 = sand.u32 %s234, 7
      %s237 = smul.u32 %s235, 16
      %s238 = sadd.s32 %s236, %s237
      %s239 = smul.addr %s238, 16
      %s240 = scalar_lea.hbm %s1, %s239
      %s241 = sadd.s32 7, %s135
      %s242 = scalar_lea.vmem [#allocation2], %s241
      %s244 = sshll.u32 %s242, 4
      %s245 = int_to_ptr.vmem [resolvable:$true] %s244
      %247 = dma.hbm_to_vmem [thread:$0]  %s240, 32, %s245, %s137, 128, 128, 1
    $region9: #{tpu_custom_call.1} parent=1 // pred_fallthru
      _
    %s248 = smul.u32 0, 2
    %s249 = smul.addr %s248, 8
    %s250 = scalar_lea.vmem [#allocation2], %s249
    %s251 = smul.u32 8, 1
    %s252 = smul.u32 %s251, 2
    %s253 = sshll.u32 %s252, 4
    %254 = dma.done [#allocation3], %s253
    %v255 = vld [vmem:[%s250] sm:$0xff]
    %v256 = vld [vmem:[%s250 + $0x8] sm:$0xff]
    %v257 = vmul.f32 %v255, %v255
    %v258 = vmul.f32 %v256, %v256
    %v259 = vadd.f32 %v257, %v258
    %260 = vadd.xlane.f32.xlu0 %v259
    %v261 = vpop.xlane.xlu0 %260
    %v262 = vmax.f32 %v261, 1e-24
    %v263 = vrsqrt.pop %v262
    %v264 = vmul.f32 %v255, %v263
    %v265 = vmul.f32 %v256, %v263
    %266 = vst [vmem:[#allocation6] sm:$0xff] %v264
    %267 = vst [vmem:[#allocation6 + $0x8] sm:$0xff] %v265
    // Predicated region
    $region10: #{tpu_custom_call.1} parent=1 // pred_check
      _
    $region11: #{tpu_custom_call.1} parent=1 // pred_check_branch
      %269 = sbr.rel (0) target = $region13
    $region12: #{tpu_custom_call.1} parent=1 // pred_region
      %s271 = ssub.s32 256, 256
      %272 = vsyncadd [#allocation7], %s271
      %s274 = sshll.u32 [#allocation6], 4
      %s275 = int_to_ptr.vmem [resolvable:$true] %s274
      %277 = dma.vmem_to_hbm [thread:$0]  %s275, 256, %s2, [#allocation7]
    $region13: #{tpu_custom_call.1} parent=1 // pred_fallthru
      _
    // Predicated region
    $region14: #{tpu_custom_call.1} parent=1 // pred_check
      _
    $region15: #{tpu_custom_call.1} parent=1 // pred_check_branch
      %279 = sbr.rel (0) target = $region17
    $region16: #{tpu_custom_call.1} parent=1 // pred_region
      %280 = dma.done [#allocation7], 256
    $region17: #{tpu_custom_call.1} parent=1 // pred_fallthru
      _
    %281 = vsyncpa [#allocation7], 1
  %282 = vsyncmov [#allocation3]
  %s283 = vpop.sfrf %282
  %p284 = scmp.eq.s32.totalorder %s283, 0
  %p285 = pneg %p284
  %287 = shalt.err (%p285)
  %s288 = scalar_lea.sflag [#allocation3], 1
  %289 = vsyncmov %s288
  %s290 = vpop.sfrf %289
  %p291 = scmp.eq.s32.totalorder %s290, 0
  %p292 = pneg %p291
  %294 = shalt.err (%p292)

</llo_original>
